<compile_context>
chip_gen: v7x
topology: tpu7x:2x2x1
jax: 0.10.0
libtpu: 0.0.40
codegen_flags: <defaults>
</compile_context>

<pallas_src>
import jax
import jax.numpy as jnp
from jax.experimental import pallas as pl
from jax.experimental.pallas import tpu as pltpu

IN_FEATURES = 129
IN_MAIN = 128          # MXU / lane aligned part of K
OUT_FEATURES = 128
LANE = 128


def _round_up(x, n):
    return ((x + n - 1) // n) * n


def _sublane_multiple(dtype):
    # (8, 128) tiling is for 32-bit elements; sub-32-bit dtypes pack along
    # sublanes, so the second-to-last block dim must round to 16 (bf16) / 32 (int8).
    return {4: 8, 2: 16, 1: 32}.get(jnp.dtype(dtype).itemsize, 8)


def _row_tile(m, block_m, dtype):
    sub = _sublane_multiple(dtype)
    # Cap at ceil(m/2) so the 1-D grid has >= 2 steps whenever there is enough
    # work: on v7x, dimension_semantics=("parallel",) then shards the M axis
    # across both TensorCores instead of serializing one oversized tile.
    tm = min(block_m, _round_up(pl.cdiv(m, 2), sub))
    return max(tm, sub)


# ----------------------------------------------------------------------------
# Packed path: module-faithful forward on the concatenated [..., 129] input.
# ----------------------------------------------------------------------------
def _fusion_kernel_packed(x_ref, w_ref, b_ref, o_ref):
    # x_ref: (TM, 129)   row tile (HBM rows are physically 256 lanes wide)
    # w_ref: (129, 128)  W.T (K, N), VMEM-resident across the whole grid
    # b_ref: (1, 128)    bias,       VMEM-resident
    # o_ref: (TM, 128)
    acc = jnp.dot(x_ref[...], w_ref[...], preferred_element_type=jnp.float32)
    o_ref[...] = (acc + b_ref[...].astype(jnp.float32)).astype(o_ref.dtype)


def fusion_layer(x, weight, bias, *, block_m=4096, out_dtype=None):
    """FusionLayer.forward: x [..., 129] -> [..., 128].

    NOTE: a [..., 129] f32 array is laid out (and DMA'd) as 256 lanes per row in
    HBM, so this path pays ~2x the logical input bytes. If the concat can be
    removed upstream, call `fusion_layer_split` with the pre-concat operands.
    """
    orig_shape = x.shape
    assert orig_shape[-1] == IN_FEATURES
    m = 1
    for d in orig_shape[:-1]:
        m *= d
    x2d = x.reshape(m, IN_FEATURES)

    w_t = weight.T                              # (129, 128) = (K, N), ~66 KB
    b2d = bias.reshape(1, OUT_FEATURES)
    out_dtype = out_dtype or x.dtype

    tm = _row_tile(m, block_m, x.dtype)
    grid = (pl.cdiv(m, tm),)

    itemsize = jnp.dtype(x.dtype).itemsize
    in_lanes = _round_up(IN_FEATURES, LANE)     # 129 -> 256 physical lanes/row
    cost = pl.CostEstimate(
        flops=2 * m * IN_FEATURES * OUT_FEATURES,
        transcendentals=0,
        bytes_accessed=(itemsize * m * in_lanes
                        + jnp.dtype(out_dtype).itemsize * m * OUT_FEATURES
                        + 4 * (IN_FEATURES * OUT_FEATURES + OUT_FEATURES)),
    )

    out = pl.pallas_call(
        _fusion_kernel_packed,
        out_shape=jax.ShapeDtypeStruct((m, OUT_FEATURES), out_dtype),
        grid=grid,
        in_specs=[
            pl.BlockSpec((tm, IN_FEATURES), lambda i: (i, 0)),           # x tile
            pl.BlockSpec((IN_FEATURES, OUT_FEATURES), lambda i: (0, 0)),  # W.T
            pl.BlockSpec((1, OUT_FEATURES), lambda i: (0, 0)),            # bias
        ],
        out_specs=pl.BlockSpec((tm, OUT_FEATURES), lambda i: (i, 0)),
        compiler_params=pltpu.CompilerParams(
            dimension_semantics=("parallel",),   # v7x: shard M across 2 TCs
        ),
        cost_estimate=cost,
    )(x2d, w_t, b2d)

    return out.reshape(*orig_shape[:-1], OUT_FEATURES)


# ----------------------------------------------------------------------------
# Lane-dense fast path: take the two pre-concat operands separately.
# ----------------------------------------------------------------------------
def _fusion_kernel_split(xd_ref, xe_ref, wm_ref, wl_ref, b_ref, o_ref):
    # xd_ref: (TM, 128)  dense features (lane-dense)
    # xe_ref: (TM, 1)    129th 'fusion' feature column
    # wm_ref: (128, 128) W[:, :128].T   (resident)
    # wl_ref: (1, 128)   W[:, 128]      (resident)
    # b_ref:  (1, 128)   bias           (resident)
    acc = jnp.dot(xd_ref[...], wm_ref[...], preferred_element_type=jnp.float32)
    acc = acc + xe_ref[...].astype(jnp.float32) * wl_ref[...].astype(jnp.float32)
    o_ref[...] = (acc + b_ref[...].astype(jnp.float32)).astype(o_ref.dtype)


def fusion_layer_split(x_dense, x_extra, weight, bias, *, block_m=4096,
                       out_dtype=None):
    """Fast path avoiding the 129-lane padded slab.

    x_dense: [..., 128]   the dense operand of the upstream concat
    x_extra: [...] or [..., 1]   the 1-wide 'fusion' feature
    """
    orig_shape = x_dense.shape
    assert orig_shape[-1] == IN_MAIN
    m = 1
    for d in orig_shape[:-1]:
        m *= d
    xd2 = x_dense.reshape(m, IN_MAIN)
    xe2 = x_extra.reshape(m, 1)

    wm = weight[:, :IN_MAIN].T                  # (128, 128)
    wl = weight[:, IN_MAIN:].T                  # (1, 128)
    b2d = bias.reshape(1, OUT_FEATURES)
    out_dtype = out_dtype or x_dense.dtype

    tm = _row_tile(m, block_m, x_dense.dtype)
    grid = (pl.cdiv(m, tm),)

    itemsize = jnp.dtype(x_dense.dtype).itemsize
    cost = pl.CostEstimate(
        flops=2 * m * IN_FEATURES * OUT_FEATURES,
        transcendentals=0,
        bytes_accessed=(itemsize * (m * IN_MAIN + m)
                        + jnp.dtype(out_dtype).itemsize * m * OUT_FEATURES
                        + 4 * (IN_FEATURES * OUT_FEATURES + OUT_FEATURES)),
    )

    out = pl.pallas_call(
        _fusion_kernel_split,
        out_shape=jax.ShapeDtypeStruct((m, OUT_FEATURES), out_dtype),
        grid=grid,
        in_specs=[
            pl.BlockSpec((tm, IN_MAIN), lambda i: (i, 0)),              # dense tile
            pl.BlockSpec((tm, 1), lambda i: (i, 0)),                    # extra col
            pl.BlockSpec((IN_MAIN, OUT_FEATURES), lambda i: (0, 0)),    # W main
            pl.BlockSpec((1, OUT_FEATURES), lambda i: (0, 0)),          # W last
            pl.BlockSpec((1, OUT_FEATURES), lambda i: (0, 0)),          # bias
        ],
        out_specs=pl.BlockSpec((tm, OUT_FEATURES), lambda i: (i, 0)),
        compiler_params=pltpu.CompilerParams(
            dimension_semantics=("parallel",),
        ),
        cost_estimate=cost,
    )(xd2, xe2, wm, wl, b2d)

    return out.reshape(*orig_shape[:-1], OUT_FEATURES)


if __name__ == "__main__":
    key = jax.random.PRNGKey(0)
    kx, kw, kb, kx2 = jax.random.split(key, 4)

    # Deterministic synthetic parameters (PyTorch nn.Linear shapes).
    bound = 1.0 / (IN_FEATURES ** 0.5)
    weight = jax.random.uniform(
        kw, (OUT_FEATURES, IN_FEATURES), jnp.float32, -bound, bound)
    bias = jax.random.uniform(
        kb, (OUT_FEATURES,), jnp.float32, -bound, bound)

    # Small input consistent with forward: batch=2, seq=8, features=129.
    x = jax.random.normal(kx, (2, 8, IN_FEATURES), jnp.float32)
    ref = x @ weight.T + bias

    # Module-faithful packed path.
    out = jax.block_until_ready(fusion_layer(x, weight, bias))
    assert out.shape == (2, 8, OUT_FEATURES)
    assert jnp.allclose(out, ref, atol=1e-4, rtol=1e-4)

    # Lane-dense fast path on the pre-concat operands.
    out_split = jax.block_until_ready(
        fusion_layer_split(x[..., :IN_MAIN], x[..., IN_MAIN], weight, bias))
    assert jnp.allclose(out_split, ref, atol=1e-4, rtol=1e-4)

    # Larger ragged case: grid > 1, two-step grid, partial last tile.
    x_big = jax.random.normal(kx2, (5, 1000, IN_FEATURES), jnp.float32)
    ref_big = x_big @ weight.T + bias
    out_big = jax.block_until_ready(fusion_layer(x_big, weight, bias))
    assert jnp.allclose(out_big, ref_big, atol=1e-3, rtol=1e-3)
    out_big_split = jax.block_until_ready(
        fusion_layer_split(x_big[..., :IN_MAIN], x_big[..., IN_MAIN],
                           weight, bias))
    assert jnp.allclose(out_big_split, ref_big, atol=1e-3, rtol=1e-3)

    print("KERNEL_OK")
</pallas_src>

<mosaic_0001>
module attributes {stable_mosaic.version = 11 : i64} {
  func.func @_fusion_kernel_packed(%arg0: i32, %arg1: memref<8x129xf32, #tpu.memory_space<vmem>>, %arg2: memref<129x128xf32, #tpu.memory_space<vmem>>, %arg3: memref<1x128xf32, #tpu.memory_space<vmem>>, %arg4: memref<8x128xf32, #tpu.memory_space<vmem>>) attributes {dimension_semantics = [#tpu.dimension_semantics<parallel>], iteration_bounds = array<i64: 2>, scalar_prefetch = 0 : i64, scratch_operands = 0 : i64, tpu.core_type = #tpu.core_type<tc>, window_params = [{transform_indices = @transform_0, window_bounds = array<i64: 8, 129>}, {pipeline_mode = #tpu.pipeline_mode<synchronous>, transform_indices = @transform_1, window_bounds = array<i64: 129, 128>}, {pipeline_mode = #tpu.pipeline_mode<synchronous>, transform_indices = @transform_2, window_bounds = array<i64: 1, 128>}, {transform_indices = @transform_3, window_bounds = array<i64: 8, 128>}]} {
    %c0 = arith.constant 0 : index
    %c0_0 = arith.constant 0 : index
    %0 = vector.load %arg1[%c0, %c0_0] : memref<8x129xf32, #tpu.memory_space<vmem>>, vector<8x129xf32>
    %c0_1 = arith.constant 0 : index
    %c0_2 = arith.constant 0 : index
    %1 = vector.load %arg2[%c0_1, %c0_2] : memref<129x128xf32, #tpu.memory_space<vmem>>, vector<129x128xf32>
    %cst = arith.constant dense<0.000000e+00> : vector<8x128xf32>
    %2 = tpu.matmul %0, %1, %cst {dimension_numbers = #tpu.dot_dimension_numbers<[1], [0], [0], [1], [0, 0, 1, 1], [], []>} : vector<8x129xf32>, vector<129x128xf32>, vector<8x128xf32> -> vector<8x128xf32>
    %c0_3 = arith.constant 0 : index
    %c0_4 = arith.constant 0 : index
    %3 = vector.load %arg3[%c0_3, %c0_4] : memref<1x128xf32, #tpu.memory_space<vmem>>, vector<1x128xf32>
    %4 = vector.broadcast %3 : vector<1x128xf32> to vector<8x128xf32>
    %5 = arith.addf %2, %4 : vector<8x128xf32>
    %c0_5 = arith.constant 0 : index
    %c0_6 = arith.constant 0 : index
    %6 = vector.load %arg4[%c0_5, %c0_6] : memref<8x128xf32, #tpu.memory_space<vmem>>, vector<8x128xf32>
    tpu.vector_store %arg4[%c0_5, %c0_6], %5 {strides = array<i32>} : memref<8x128xf32, #tpu.memory_space<vmem>>, vector<8x128xf32>,
    return
  }
  func.func @transform_0(%arg0: i32) -> (i32, i32) {
    %c0_i32 = arith.constant 0 : i32
    %c0_i32_0 = arith.constant 0 : i32
    return %arg0, %c0_i32 : i32, i32
  }
  func.func @transform_1(%arg0: i32) -> (i32, i32) {
    %c0_i32 = arith.constant 0 : i32
    %c0_i32_0 = arith.constant 0 : i32
    %c0_i32_1 = arith.constant 0 : i32
    return %c0_i32, %c0_i32_0 : i32, i32
  }
  func.func @transform_2(%arg0: i32) -> (i32, i32) {
    %c0_i32 = arith.constant 0 : i32
    %c0_i32_0 = arith.constant 0 : i32
    %c0_i32_1 = arith.constant 0 : i32
    return %c0_i32, %c0_i32_0 : i32, i32
  }
  func.func @transform_3(%arg0: i32) -> (i32, i32) {
    %c0_i32 = arith.constant 0 : i32
    %c0_i32_0 = arith.constant 0 : i32
    return %arg0, %c0_i32 : i32, i32
  }
}

</mosaic_0001>

<llo_original>
// kernel: tpu_custom_call.1
$region0: #{tpu_custom_call.1}
  #allocation0 [shape = 'u32[]', space=smem, size = 0x4, offset = 0x4, fixed_abs, tag = 'smem constant byte address 0x4 - core index']
  #allocation1 [shape = 'u32[144,128]{1,0:T(1,128)}', space=vmem, size = 0x12000, scoped, tag = 'internal scratch']
  %s0 = inlined_call_operand.hbm [shape: f32[16,129], index: 0, kind: input, shape index: {}]
  %s1 = inlined_call_operand.hbm [shape: f32[129,128], index: 1, kind: input, shape index: {}]
  %s2 = inlined_call_operand.vmem [shape: f32[1,128], index: 2, kind: input, shape index: {}]
  %s3 = inlined_call_operand.hbm [shape: f32[16,128], index: 3, kind: output, shape index: {}]
  %s4 = sld [smem:[#allocation0]]
  $region53: #{tpu_custom_call.1} parent=0
    _
  %s6 = ssub.s32 1, %s4
  %s7 = scalar_select 0, %s6, %s4
  $region1: #{tpu_custom_call.1} parent=0
    #allocation2 [shape = 'u8[16384]{0}', space=vmem, size = 0x4000, scoped, tag = 'input window, operand 0']
    #allocation3 [shape = 's32[2]{0}', space=sflag, size = 0x8, scoped, tag = 'scoped memory for tpu_custom_call.1']
    #allocation4 [shape = 's32[2]{0}', space=sflag, size = 0x8, scoped, tag = 'scoped memory for tpu_custom_call.1']
    #allocation5 [shape = 'u8[69632]{0}', space=vmem, size = 0x11000, scoped, tag = 'input window, operand 1, single buffered']
    #allocation6 [shape = 's32[1]{0}', space=sflag, size = 0x4, scoped, tag = 'scoped memory for tpu_custom_call.1']
    #allocation7 [shape = 'u8[8192]{0}', space=vmem, size = 0x2000, scoped, tag = 'output window, operand 0']
    %8 = vsyncpa [#allocation3], 0
    %s9 = scalar_lea.sflag [#allocation3], 1
    %10 = vsyncpa %s9, 0
    %11 = vsyncpa [#allocation6], 0
    %12 = vsyncpa [#allocation4], 0
    %s13 = scalar_lea.sflag [#allocation4], 1
    %14 = vsyncpa %s13, 0
    loop: start=0, step=1, limit=4
    $region2: #{tpu_custom_call.1} parent=1 // loop_pre_header
      _
    $region3: #{tpu_custom_call.1} parent=1 // loop_header
      %s16 = sphi 0, %s20
      %p17 = scmp.ge.s32.totalorder %s16, 4
      %s26 = sphi 0, %s28
      %s29 = sphi 0, %s26
      %s30 = sphi 0, %s29
      %s46 = sphi 0, %s30
      %s50 = sphi 0, %s50
      %s52 = sphi 0, %s50
      %s53 = sphi 0, %s52
      %s67 = sphi 0, %s53
      %s71 = sphi 0, %s71
      %s73 = sphi 0, %s71
      %s74 = sphi 0, %s73
      %s88 = sphi 0, %s74
      %s94 = sphi 0, %s96
      %s97 = sphi 0, %s94
      %s98 = sphi 0, %s97
      %s114 = sphi 0, %s98
    $region4: #{tpu_custom_call.1} parent=1 // loop_header_branch
      %19 = sbr.rel (%p17) target = $region8
    $region5: #{tpu_custom_call.1} parent=1 // loop_body
      %s21 = ssub.s32 %s16, 1
      %s22 = ssub.s32 %s16, 2
      %s23 = sadd.s32 %s16, 1
      %s24 = ssub.s32 %s16, %s23
      %p25 = scmp.eq.s32.totalorder %s24, 0
      %s27 = sadd.s32 %s26, 1
      %s28 = scalar_select %p25, %s26, %s27
      %p31 = pneg %p25
      %p32 = scmp.eq.s32.totalorder %s16, 1
      %p33 = por %p31, %p32
      %p34 = scmp.ne.s32.totalorder %s26, %s29
      %p35 = scmp.eq.s32.totalorder %s16, 0
      %p36 = por %p34, %p35
      %p37 = scmp.ne.s32.totalorder %s26, %s29
      %p38 = scmp.eq.s32.totalorder %s21, 1
      %p39 = por %p37, %p38
      %p40 = scmp.ne.s32.totalorder %s29, %s30
      %p41 = scmp.eq.s32.totalorder %s21, 0
      %p42 = por %p40, %p41
      %p43 = scmp.ne.s32.totalorder %s29, %s30
      %p44 = scmp.eq.s32.totalorder %s22, 1
      %p45 = por %p43, %p44
      %p47 = scmp.ne.s32.totalorder %s30, %s46
      %p48 = scmp.eq.s32.totalorder %s22, 0
      %p49 = por %p47, %p48
      %s51 = sadd.s32 %s50, 1
      %p54 = scmp.eq.s32.totalorder %s16, 1
      %p55 = scmp.ne.s32.totalorder %s50, %s52
      %p56 = scmp.eq.s32.totalorder %s16, 0
      %p57 = por %p55, %p56
      %p58 = scmp.ne.s32.totalorder %s50, %s52
      %p59 = scmp.eq.s32.totalorder %s21, 1
      %p60 = por %p58, %p59
      %p61 = scmp.ne.s32.totalorder %s52, %s53
      %p62 = scmp.eq.s32.totalorder %s21, 0
      %p63 = por %p61, %p62
      %p64 = scmp.ne.s32.totalorder %s52, %s53
      %p65 = scmp.eq.s32.totalorder %s22, 1
      %p66 = por %p64, %p65
      %p68 = scmp.ne.s32.totalorder %s53, %s67
      %p69 = scmp.eq.s32.totalorder %s22, 0
      %p70 = por %p68, %p69
      %s72 = sadd.s32 %s71, 1
      %p75 = scmp.eq.s32.totalorder %s16, 1
      %p76 = scmp.ne.s32.totalorder %s71, %s73
      %p77 = scmp.eq.s32.totalorder %s16, 0
      %p78 = por %p76, %p77
      %p79 = scmp.ne.s32.totalorder %s71, %s73
      %p80 = scmp.eq.s32.totalorder %s21, 1
      %p81 = por %p79, %p80
      %p82 = scmp.ne.s32.totalorder %s73, %s74
      %p83 = scmp.eq.s32.totalorder %s21, 0
      %p84 = por %p82, %p83
      %p85 = scmp.ne.s32.totalorder %s73, %s74
      %p86 = scmp.eq.s32.totalorder %s22, 1
      %p87 = por %p85, %p86
      %p89 = scmp.ne.s32.totalorder %s74, %s88
      %p90 = scmp.eq.s32.totalorder %s22, 0
      %p91 = por %p89, %p90
      %s92 = ssub.s32 %s16, %s23
      %p93 = scmp.eq.s32.totalorder %s92, 0
      %s95 = sadd.s32 %s94, 1
      %s96 = scalar_select %p93, %s94, %s95
      %p99 = pneg %p93
      %p100 = scmp.eq.s32.totalorder %s16, 1
      %p101 = por %p99, %p100
      %p102 = scmp.ne.s32.totalorder %s94, %s97
      %p103 = scmp.eq.s32.totalorder %s16, 0
      %p104 = por %p102, %p103
      %p105 = scmp.ne.s32.totalorder %s94, %s97
      %p106 = scmp.eq.s32.totalorder %s21, 1
      %p107 = por %p105, %p106
      %p108 = scmp.ne.s32.totalorder %s97, %s98
      %p109 = scmp.eq.s32.totalorder %s21, 0
      %p110 = por %p108, %p109
      %p111 = scmp.ne.s32.totalorder %s97, %s98
      %p112 = scmp.eq.s32.totalorder %s22, 1
      %p113 = por %p111, %p112
      %p115 = scmp.ne.s32.totalorder %s98, %s114
      %p116 = scmp.eq.s32.totalorder %s22, 0
      %p117 = por %p115, %p116
      %p118 = scmp.le.s32.totalorder 1, %s16
      %p119 = scmp.lt.s32.totalorder %s16, 3
      %p120 = pnand %p118, %p119
      %p121 = pneg %p120
      // Predicated region
      $region9: #{tpu_custom_call.1} parent=5 // pred_check
        _
      $region10: #{tpu_custom_call.1} parent=5 // pred_check_branch
        %123 = sbr.rel (%p120) target = $region12
      $region11: #{tpu_custom_call.1} parent=5 // pred_region
        %s124 = ssub.s32 %s16, 1
        // Predicated region
        $region13: #{tpu_custom_call.1} parent=11 // pred_check
          %p125 = pneg %p63
        $region14: #{tpu_custom_call.1} parent=11 // pred_check_branch
          %127 = sbr.rel (%p125) target = $region16
        $region15: #{tpu_custom_call.1} parent=11 // pred_region
          %s129 = ssub.s32 2176, 2176
          %130 = vsyncadd [#allocation6], %s129
          %s131 = sshll.u32 [#allocation5], 4
          %s132 = int_to_ptr.vmem [resolvable:$true] %s131
          %137 = dma.hbm_to_vmem [thread:$0]  %s1, 2176, %s132, [#allocation6], 128, 128, 8
        $region16: #{tpu_custom_call.1} parent=11 // pred_fallthru
          _
        // Predicated region
        $region17: #{tpu_custom_call.1} parent=11 // pred_check
          %p138 = pneg %p84
        $region18: #{tpu_custom_call.1} parent=11 // pred_check_branch
          %140 = sbr.rel (%p138) target = $region20
        $region19: #{tpu_custom_call.1} parent=11 // pred_region
          _
        $region20: #{tpu_custom_call.1} parent=11 // pred_fallthru
          _
      $region12: #{tpu_custom_call.1} parent=5 // pred_fallthru
        _
      %p141 = scmp.lt.s32.totalorder %s16, 2
      // Predicated region
      $region21: #{tpu_custom_call.1} parent=5 // pred_check
        %p142 = pneg %p141
      $region22: #{tpu_custom_call.1} parent=5 // pred_check_branch
        %144 = sbr.rel (%p142) target = $region24
      $region23: #{tpu_custom_call.1} parent=5 // pred_region
        // Predicated region
        $region25: #{tpu_custom_call.1} parent=23 // pred_check
          %p145 = pneg %p36
        $region26: #{tpu_custom_call.1} parent=23 // pred_check_branch
          %147 = sbr.rel (%p145) target = $region28
        $region27: #{tpu_custom_call.1} parent=23 // pred_region
          %s148 = sand.u32 %s26, 1
          %s149 = scalar_lea.sflag [#allocation3], %s148
          %s150 = sand.u32 %s26, 1
          %s151 = smul.addr %s150, 16
          %s152 = scalar_lea.vmem [#allocation2], %s151
          %s154 = ssub.s32 256, 256
          %155 = vsyncadd %s149, %s154
          %s156 = smul.addr %s16, 2
          %s157 = smul.addr %s156, 128
          %s158 = scalar_lea.hbm %s0, %s157
          %s160 = sshll.u32 %s152, 4
          %s161 = int_to_ptr.vmem [resolvable:$true] %s160
          %163 = dma.hbm_to_vmem [thread:$0]  %s158, 256, %s161, %s149
        $region28: #{tpu_custom_call.1} parent=23 // pred_fallthru
          _
      $region24: #{tpu_custom_call.1} parent=5 // pred_fallthru
        _
      %p164 = scmp.le.s32.totalorder 1, %s16
      %p165 = scmp.lt.s32.totalorder %s16, 3
      %p166 = pnand %p164, %p165
      %p167 = pneg %p166
      // Predicated region
      $region29: #{tpu_custom_call.1} parent=5 // pred_check
        _
      $region30: #{tpu_custom_call.1} parent=5 // pred_check_branch
        %169 = sbr.rel (%p166) target = $region32
      $region31: #{tpu_custom_call.1} parent=5 // pred_region
        %s170 = ssub.s32 %s16, 1
        %s171 = sand.u32 %s29, 1
        %s172 = scalar_lea.sflag [#allocation3], %s171
        %s173 = sand.u32 %s29, 1
        %s174 = smul.addr %s173, 16
        %s175 = scalar_lea.vmem [#allocation2], %s174
        // Predicated region
        $region33: #{tpu_custom_call.1} parent=31 // pred_check
          %p176 = pneg %p42
        $region34: #{tpu_custom_call.1} parent=31 // pred_check_branch
          %178 = sbr.rel (%p176) target = $region36
        $region35: #{tpu_custom_call.1} parent=31 // pred_region
          %179 = dma.done %s172, 256
        $region36: #{tpu_custom_call.1} parent=31 // pred_fallthru
          _
        // Predicated region
        $region37: #{tpu_custom_call.1} parent=31 // pred_check
          %p180 = pneg %p63
        $region38: #{tpu_custom_call.1} parent=31 // pred_check_branch
          %182 = sbr.rel (%p180) target = $region40
        $region39: #{tpu_custom_call.1} parent=31 // pred_region
          %183 = dma.done [#allocation6], 2176
        $region40: #{tpu_custom_call.1} parent=31 // pred_fallthru
          _
        %s184 = sand.u32 %s29, 1
        %s185 = scalar_lea.sflag [#allocation3], %s184
        %s186 = sand.u32 %s29, 1
        %s187 = smul.addr %s186, 16
        %s188 = scalar_lea.vmem [#allocation2], %s187
        %p189 = pneg %p42
        %p190 = pneg %p39
        %p191 = pneg %p63
        %p192 = pneg %p60
        %p193 = pneg %p84
        %p194 = pneg %p81
        %p195 = pneg %p110
        %p196 = pneg %p107
        %s197 = sand.u32 %s97, 1
        %s198 = scalar_lea.sflag [#allocation4], %s197
        %s199 = sand.u32 %s97, 1
        %s200 = smul.addr %s199, 8
        %s201 = scalar_lea.vmem [#allocation7], %s200
        %v202 = vld [vmem:[%s175] sm:$0xff]
        %v203 = vld [vmem:[%s175 + $0x8] sm:$0xff]
        %v204 = vld [vmem:[#allocation5] sm:$0xff]
        %v205 = vld [vmem:[#allocation5 + $0x8] sm:$0xff]
        %v206 = vld [vmem:[#allocation5 + $0x10] sm:$0xff]
        %v207 = vld [vmem:[#allocation5 + $0x18] sm:$0xff]
        %v208 = vld [vmem:[#allocation5 + $0x20] sm:$0xff]
        %v209 = vld [vmem:[#allocation5 + $0x28] sm:$0xff]
        %v210 = vld [vmem:[#allocation5 + $0x30] sm:$0xff]
        %v211 = vld [vmem:[#allocation5 + $0x38] sm:$0xff]
        %v212 = vld [vmem:[#allocation5 + $0x40] sm:$0xff]
        %v213 = vld [vmem:[#allocation5 + $0x48] sm:$0xff]
        %v214 = vld [vmem:[#allocation5 + $0x50] sm:$0xff]
        %v215 = vld [vmem:[#allocation5 + $0x58] sm:$0xff]
        %v216 = vld [vmem:[#allocation5 + $0x60] sm:$0xff]
        %v217 = vld [vmem:[#allocation5 + $0x68] sm:$0xff]
        %v218 = vld [vmem:[#allocation5 + $0x70] sm:$0xff]
        %v219 = vld [vmem:[#allocation5 + $0x78] sm:$0xff]
        %v220 = vld [vmem:[#allocation5 + $0x80] sm:$0x1]
        %v221 = vld [vmem:[%s2] sm:$0x1]
        %v223 = vlaneseq
        %v224 = vshrl.u32 %v223, 7
        %v225 = vsub.s32 0, %v224
        %v226 = vrot.slane %v221, %v225
        %vm228 = vcmask 7168
        %v230 = vsel %vm228, %v203, 0
        %vm232 = vcmask 1040384
        %v234 = vsel %vm232, %v220, 0
        %236 = vmatprep.subr.mxu0 0.0
        %237 = vmatpush1.msra.mxu0 %v204
        %238 = vmatprep.subr.mxu0 0.0
        %239 = vmatpush1.msra.mxu0 %v205
        %240 = vmatprep.subr.mxu0 0.0
        %241 = vmatpush1.msra.mxu0 %v206
        %242 = vmatprep.subr.mxu0 0.0
        %243 = vmatpush1.msra.mxu0 %v207
        %244 = vmatprep.subr.mxu0 0.0
        %245 = vmatpush1.msra.mxu0 %v208
        %246 = vmatprep.subr.mxu0 0.0
        %247 = vmatpush1.msra.mxu0 %v209
        %248 = vmatprep.subr.mxu0 0.0
        %249 = vmatpush1.msra.mxu0 %v210
        %250 = vmatprep.subr.mxu0 0.0
        %251 = vmatpush1.msra.mxu0 %v211
        %252 = vmatprep.subr.mxu0 0.0
        %253 = vmatpush1.msra.mxu0 %v212
        %254 = vmatprep.subr.mxu0 0.0
        %255 = vmatpush1.msra.mxu0 %v213
        %256 = vmatprep.subr.mxu0 0.0
        %257 = vmatpush1.msra.mxu0 %v214
        %258 = vmatprep.subr.mxu0 0.0
        %259 = vmatpush1.msra.mxu0 %v215
        %260 = vmatprep.subr.mxu0 0.0
        %261 = vmatpush1.msra.mxu0 %v216
        %262 = vmatprep.subr.mxu0 0.0
        %263 = vmatpush1.msra.mxu0 %v217
        %264 = vmatprep.subr.mxu0 0.0
        %265 = vmatpush1.msra.mxu0 %v218
        %266 = vmatprep.subr.mxu0 0.0
        %267 = vmatpush1.msra.mxu0 %v219
        %268 = vmatprep.subr.mxu0 0.0
        %269 = vmatpush1.msra.mxu0 %v234
        %270 = vmatprep.subr.mxu0 0.0
        %271 = vmatpush1.msra.mxu0 0.0
        %272 = vmatprep.subr.mxu0 0.0
        %273 = vmatpush1.msra.mxu0 0.0
        %274 = vmatprep.subr.mxu0 0.0
        %275 = vmatpush1.msra.mxu0 0.0
        %276 = vmatprep.subr.mxu0 0.0
        %277 = vmatpush1.msra.mxu0 0.0
        %278 = vmatprep.subr.mxu0 0.0
        %279 = vmatpush1.msra.mxu0 0.0
        %280 = vmatprep.subr.mxu0 0.0
        %281 = vmatpush1.msra.mxu0 0.0
        %282 = vmatprep.subr.mxu0 0.0
        %283 = vmatpush1.msra.mxu0 0.0
        %284 = vmatprep.subr.mxu0 0.0
        %285 = vmatpush1.msra.mxu0 0.0
        %286 = vmatprep.subr.mxu0 0.0
        %287 = vmatpush1.msra.mxu0 0.0
        %288 = vmatprep.subr.mxu0 0.0
        %289 = vmatpush1.msra.mxu0 0.0
        %290 = vmatprep.subr.mxu0 0.0
        %291 = vmatpush1.msra.mxu0 0.0
        %292 = vmatprep.subr.mxu0 0.0
        %293 = vmatpush1.msra.mxu0 0.0
        %294 = vmatprep.subr.mxu0 0.0
        %295 = vmatpush1.msra.mxu0 0.0
        %296 = vmatprep.subr.mxu0 0.0
        %297 = vmatpush1.msra.mxu0 0.0
        %298 = vmatprep.subr.mxu0 0.0
        %299 = vmatpush1.msra.mxu0 0.0
        %300 = vmatprep.mubr.f32.mxu0 %v230
        %301 = vmatmul.mubr.f32.gmra.mrb[0].mxu0 %v202
        %v302 = vpop.f32.mrb[0].mxu0
        %v303 = vadd.f32 %v226, %v302
        %v304 = vpop.f32.mrb[0].mxu0
        %305 = vdwg.mxu0
        %306 = vst [vmem:[%s201] sm:$0xff] %v303
        %s307 = sand.u32 %s97, 1
        %s308 = scalar_lea.sflag [#allocation4], %s307
        %s309 = sand.u32 %s97, 1
        %s310 = smul.addr %s309, 8
        %s311 = scalar_lea.vmem [#allocation7], %s310
        // Predicated region
        $region41: #{tpu_custom_call.1} parent=31 // pred_check
          %p312 = pneg %p107
        $region42: #{tpu_custom_call.1} parent=31 // pred_check_branch
          %314 = sbr.rel (%p312) target = $region44
        $region43: #{tpu_custom_call.1} parent=31 // pred_region
          %s316 = ssub.s32 128, 128
          %317 = vsyncadd %s308, %s316
          %s318 = smul.addr %s21, 128
          %s319 = scalar_lea.hbm %s3, %s318
          %s321 = sshll.u32 %s311, 4
          %s322 = int_to_ptr.vmem [resolvable:$true] %s321
          %324 = dma.vmem_to_hbm [thread:$0]  %s322, 128, %s319, %s308
        $region44: #{tpu_custom_call.1} parent=31 // pred_fallthru
          _
      $region32: #{tpu_custom_call.1} parent=5 // pred_fallthru
        _
      %p325 = scmp.le.s32.totalorder 2, %s16
      // Predicated region
      $region45: #{tpu_custom_call.1} parent=5 // pred_check
        %p326 = pneg %p325
      $region46: #{tpu_custom_call.1} parent=5 // pred_check_branch
        %328 = sbr.rel (%p326) target = $region48
      $region47: #{tpu_custom_call.1} parent=5 // pred_region
        %s329 = ssub.s32 %s16, 2
        // Predicated region
        $region49: #{tpu_custom_call.1} parent=47 // pred_check
          %p330 = pneg %p113
        $region50: #{tpu_custom_call.1} parent=47 // pred_check_branch
          %332 = sbr.rel (%p330) target = $region52
        $region51: #{tpu_custom_call.1} parent=47 // pred_region
          %s333 = sand.u32 %s98, 1
          %s334 = scalar_lea.sflag [#allocation4], %s333
          %s335 = sand.u32 %s98, 1
          %s336 = smul.addr %s335, 8
          %s337 = scalar_lea.vmem [#allocation7], %s336
          %338 = dma.done %s334, 128
        $region52: #{tpu_custom_call.1} parent=47 // pred_fallthru
          _
      $region48: #{tpu_custom_call.1} parent=5 // pred_fallthru
        _
    $region6: #{tpu_custom_call.1} parent=1 // loop_footer
      %s20 = sadd.s32 1, %s16
    $region7: #{tpu_custom_call.1} parent=1 // loop_footer_branch
      %15 = sbr.rel target = $region3
    $region8: #{tpu_custom_call.1} parent=1 // loop_exit
      _
    %339 = vsyncpa [#allocation3], 1
    %s340 = scalar_lea.sflag [#allocation3], 1
    %341 = vsyncpa %s340, 1
    %342 = vsyncpa [#allocation6], 1
    %343 = vsyncpa [#allocation4], 1
    %s344 = scalar_lea.sflag [#allocation4], 1
    %345 = vsyncpa %s344, 1

</llo_original>
